<compile_context>
chip_gen: v6e
topology: v6e:2x2x1
jax: 0.10.0
libtpu: 0.0.40
codegen_flags: <defaults>
</compile_context>

<pallas_src>
import functools

import jax
import jax.numpy as jnp
from jax import lax
from jax.experimental import pallas as pl
from jax.experimental.pallas import tpu as pltpu


def _bisehead_kernel(W, x_ref, m_ref, w3_ref, bb_ref, w1_ref, b1_ref, o_ref):
    # x_ref : (1, Cin, HW)   f32   input, NCHW with spatial flattened on lanes
    # m_ref : (9*Cin, HW)    cdt   0/1 halo-validity masks, tap-major
    # w3_ref: (Cmid, 9*Cin)  cdt   BN-scale-folded 3x3 weights (im2col layout)
    # bb_ref: (Cmid, 1)      f32   folded BN bias
    # w1_ref: (ncls, Cmid)   cdt   1x1 conv weights
    # b1_ref: (ncls, 1)      f32   1x1 conv bias
    # o_ref : (1, ncls, HW)        output (lane-dense last dim)
    HW = x_ref.shape[2]
    cdtype = w3_ref.dtype

    x = x_ref[0]  # (Cin, HW), f32

    # Build the 9 shifted spatial copies with lane rotations (XLU).  A shift
    # of (dy, dx) in 2D is a shift of dy*W + dx on the flattened axis; the
    # wrapped / out-of-image positions are zeroed by the precomputed masks.
    shifted = []
    for tap in range(9):  # static unroll over the 3x3 taps
        dy, dx = tap // 3 - 1, tap % 3 - 1
        shift = (-(dy * W + dx)) % HW
        shifted.append(pltpu.roll(x, shift=shift, axis=1) if shift else x)

    # (9*Cin, HW) im2col block: cast to the MXU compute dtype first, then
    # zero the conv's padding halo with the 0/1 mask (exact since mask is
    # 0/1; halves the multiply's operand width on the bf16 path).
    patches = jnp.concatenate(shifted, axis=0).astype(cdtype) * m_ref[...]

    # 3x3 conv (+ folded BN scale) as a single matmul, f32 accumulation.
    y = jnp.dot(w3_ref[...], patches, preferred_element_type=jnp.float32)
    y = jnp.maximum(y + bb_ref[...], 0.0)          # BN shift + ReLU, f32

    # Dropout(0.1) is identity at inference time.

    # 1x1 conv: (ncls, Cmid) @ (Cmid, HW) + bias.
    out = jnp.dot(w1_ref[...], y.astype(cdtype),
                  preferred_element_type=jnp.float32) + b1_ref[...]

    o_ref[0] = out.astype(o_ref.dtype)             # lane-dense (HW) store


@functools.partial(jax.jit, static_argnames=("eps", "use_bf16"))
def bisehead_forward(x_nchw, w3, bn_gamma, bn_beta, bn_mean, bn_var, w1, b1,
                     *, eps=1e-5, use_bf16=True):
    """x_nchw: (N, Cin, H, W) float32. Returns (N, nclass, H, W)."""
    N, cin, H, W = x_nchw.shape
    cmid = w3.shape[0]
    ncls = w1.shape[0]
    HW = H * W  # ideally a multiple of 128 (256 in the demo) for dense stores

    cdtype = jnp.bfloat16 if use_bf16 else jnp.float32

    # NCHW, spatial flattened onto the lane axis.  Contiguous reshape -> no
    # transpose, no pad, no extra HBM pass.
    x_flat = x_nchw.reshape(N, cin, HW)

    # Fold BN scale into the conv weights; keep the BN shift as a bias.
    scale = bn_gamma / jnp.sqrt(bn_var + eps)                      # (Cmid,)
    bn_bias = (bn_beta - bn_mean * scale).reshape(cmid, 1)         # (Cmid, 1)

    # (Cmid, Cin, 3, 3) -> (Cmid, 9*Cin), tap-major: col = (ky*3+kx)*Cin + ci
    w3_mat = (jnp.transpose(w3, (0, 2, 3, 1)).reshape(cmid, 9 * cin)
              * scale.reshape(cmid, 1)).astype(cdtype)

    w1_mat = w1.reshape(ncls, cmid).astype(cdtype)                 # (ncls, Cmid)
    b1_col = b1.reshape(ncls, 1).astype(jnp.float32)               # (ncls, 1)

    # Per-tap halo validity masks over the flattened spatial axis (replaces
    # the HBM jnp.pad): row ordering matches the kernel's im2col block.
    # Stored in the compute dtype (0/1 is exact in bf16).
    rows = jnp.arange(HW, dtype=jnp.int32) // W
    cols = jnp.arange(HW, dtype=jnp.int32) % W
    tap_masks = []
    for tap in range(9):
        dy, dx = tap // 3 - 1, tap % 3 - 1
        ok = ((rows + dy >= 0) & (rows + dy < H) &
              (cols + dx >= 0) & (cols + dx < W))
        tap_masks.append(ok)
    masks = jnp.repeat(jnp.stack(tap_masks, axis=0).astype(cdtype),
                       cin, axis=0)                                # (9*Cin, HW)

    out_flat = pl.pallas_call(
        functools.partial(_bisehead_kernel, W),
        out_shape=jax.ShapeDtypeStruct((N, ncls, HW), x_nchw.dtype),
        grid_spec=pltpu.PrefetchScalarGridSpec(
            num_scalar_prefetch=0,
            grid=(N,),
            in_specs=[
                pl.BlockSpec((1, cin, HW), lambda n: (n, 0, 0)),
                pl.BlockSpec((9 * cin, HW), lambda n: (0, 0)),
                pl.BlockSpec((cmid, 9 * cin), lambda n: (0, 0)),
                pl.BlockSpec((cmid, 1), lambda n: (0, 0)),
                pl.BlockSpec((ncls, cmid), lambda n: (0, 0)),
                pl.BlockSpec((ncls, 1), lambda n: (0, 0)),
            ],
            out_specs=pl.BlockSpec((1, ncls, HW), lambda n: (n, 0, 0)),
        ),
        compiler_params=pltpu.CompilerParams(
            dimension_semantics=("parallel",),
            vmem_limit_bytes=32 * 1024 * 1024,
        ),
    )(x_flat, masks, w3_mat, bn_bias, w1_mat, b1_col)

    # Contiguous reshape back to NCHW (free).
    return out_flat.reshape(N, ncls, H, W)


def _reference_forward(x, w3, g, b, m, v, w1, b1, eps=1e-5):
    """Pure-JAX NCHW reference (matches PyTorch inference semantics)."""
    y = lax.conv_general_dilated(x, w3, window_strides=(1, 1),
                                 padding=((1, 1), (1, 1)),
                                 dimension_numbers=("NCHW", "OIHW", "NCHW"))
    scale = (g / jnp.sqrt(v + eps)).reshape(1, -1, 1, 1)
    bias = (b - m * g / jnp.sqrt(v + eps)).reshape(1, -1, 1, 1)
    y = jnp.maximum(y * scale + bias, 0.0)
    out = lax.conv_general_dilated(y, w1, window_strides=(1, 1),
                                   padding=((0, 0), (0, 0)),
                                   dimension_numbers=("NCHW", "OIHW", "NCHW"))
    return out + b1.reshape(1, -1, 1, 1)


if __name__ == "__main__":
    # Small deterministic config: in_channels=4, inter_channels=8, nclass=4
    N, CIN, H, W = 2, 4, 16, 16
    CMID, NCLS = 8, 4

    key = jax.random.PRNGKey(0)
    k = jax.random.split(key, 8)
    x = jax.random.normal(k[0], (N, CIN, H, W), jnp.float32)
    w3 = jax.random.normal(k[1], (CMID, CIN, 3, 3), jnp.float32) * 0.1
    bn_gamma = 1.0 + 0.1 * jax.random.normal(k[2], (CMID,), jnp.float32)
    bn_beta = 0.1 * jax.random.normal(k[3], (CMID,), jnp.float32)
    bn_mean = 0.1 * jax.random.normal(k[4], (CMID,), jnp.float32)
    bn_var = jnp.abs(jax.random.normal(k[5], (CMID,), jnp.float32)) + 0.5
    w1 = jax.random.normal(k[6], (NCLS, CMID, 1, 1), jnp.float32) * 0.1
    b1 = 0.1 * jax.random.normal(k[7], (NCLS,), jnp.float32)

    ref = _reference_forward(x, w3, bn_gamma, bn_beta, bn_mean, bn_var, w1, b1)

    # Exact-precision path (f32 MXU): tight check against the XLA reference.
    out_f32 = bisehead_forward(x, w3, bn_gamma, bn_beta, bn_mean, bn_var, w1,
                               b1, use_bf16=False)
    out_f32 = jax.block_until_ready(out_f32)
    assert out_f32.shape == (N, NCLS, H, W)
    assert jnp.max(jnp.abs(out_f32 - ref)) < 1e-4

    # Fast path (bf16 MXU inputs, f32 accumulation): looser check.
    out_bf16 = bisehead_forward(x, w3, bn_gamma, bn_beta, bn_mean, bn_var, w1,
                                b1, use_bf16=True)
    out_bf16 = jax.block_until_ready(out_bf16)
    assert out_bf16.shape == (N, NCLS, H, W)
    assert jnp.max(jnp.abs(out_bf16 - ref)) < 5e-2

    print("KERNEL_OK")
</pallas_src>

<mosaic_0001>
module attributes {stable_mosaic.version = 11 : i64} {
  func.func @_bisehead_kernel(%arg0: i32, %arg1: memref<1x4x256xf32, #tpu.memory_space<vmem>>, %arg2: memref<36x256xf32, #tpu.memory_space<vmem>>, %arg3: memref<8x36xf32, #tpu.memory_space<vmem>>, %arg4: memref<8x1xf32, #tpu.memory_space<vmem>>, %arg5: memref<4x8xf32, #tpu.memory_space<vmem>>, %arg6: memref<4x1xf32, #tpu.memory_space<vmem>>, %arg7: memref<1x4x256xf32, #tpu.memory_space<vmem>>) attributes {dimension_semantics = [#tpu.dimension_semantics<parallel>], iteration_bounds = array<i64: 2>, scalar_prefetch = 0 : i64, scratch_operands = 0 : i64, tpu.core_type = #tpu.core_type<tc>, window_params = [{transform_indices = @transform_0, window_bounds = array<i64: 1, 4, 256>}, {pipeline_mode = #tpu.pipeline_mode<synchronous>, transform_indices = @transform_1, window_bounds = array<i64: 36, 256>}, {pipeline_mode = #tpu.pipeline_mode<synchronous>, transform_indices = @transform_2, window_bounds = array<i64: 8, 36>}, {pipeline_mode = #tpu.pipeline_mode<synchronous>, transform_indices = @transform_3, window_bounds = array<i64: 8, 1>}, {pipeline_mode = #tpu.pipeline_mode<synchronous>, transform_indices = @transform_4, window_bounds = array<i64: 4, 8>}, {pipeline_mode = #tpu.pipeline_mode<synchronous>, transform_indices = @transform_5, window_bounds = array<i64: 4, 1>}, {transform_indices = @transform_6, window_bounds = array<i64: 1, 4, 256>}]} {
    %c0 = arith.constant 0 : index
    %c0_0 = arith.constant 0 : index
    %c0_1 = arith.constant 0 : index
    %0 = vector.load %arg1[%c0, %c0_0, %c0_1] : memref<1x4x256xf32, #tpu.memory_space<vmem>>, vector<1x4x256xf32>
    %1 = vector.shape_cast %0 : vector<1x4x256xf32> to vector<4x256xf32>
    %c17_i32 = arith.constant 17 : i32
    %2 = tpu.dynamic_rotate %1 by %c17_i32 dim 1 : vector<4x256xf32>, i32 -> vector<4x256xf32>
    %c16_i32 = arith.constant 16 : i32
    %3 = tpu.dynamic_rotate %1 by %c16_i32 dim 1 : vector<4x256xf32>, i32 -> vector<4x256xf32>
    %c15_i32 = arith.constant 15 : i32
    %4 = tpu.dynamic_rotate %1 by %c15_i32 dim 1 : vector<4x256xf32>, i32 -> vector<4x256xf32>
    %c1_i32 = arith.constant 1 : i32
    %5 = tpu.dynamic_rotate %1 by %c1_i32 dim 1 : vector<4x256xf32>, i32 -> vector<4x256xf32>
    %c255_i32 = arith.constant 255 : i32
    %6 = tpu.dynamic_rotate %1 by %c255_i32 dim 1 : vector<4x256xf32>, i32 -> vector<4x256xf32>
    %c241_i32 = arith.constant 241 : i32
    %7 = tpu.dynamic_rotate %1 by %c241_i32 dim 1 : vector<4x256xf32>, i32 -> vector<4x256xf32>
    %c240_i32 = arith.constant 240 : i32
    %8 = tpu.dynamic_rotate %1 by %c240_i32 dim 1 : vector<4x256xf32>, i32 -> vector<4x256xf32>
    %c239_i32 = arith.constant 239 : i32
    %9 = tpu.dynamic_rotate %1 by %c239_i32 dim 1 : vector<4x256xf32>, i32 -> vector<4x256xf32>
    %10 = tpu.concatenate %2, %3, %4, %5, %1, %6, %7, %8, %9 in 0 : vector<4x256xf32>, vector<4x256xf32>, vector<4x256xf32>, vector<4x256xf32>, vector<4x256xf32>, vector<4x256xf32>, vector<4x256xf32>, vector<4x256xf32>, vector<4x256xf32> -> vector<36x256xf32>
    %c0_2 = arith.constant 0 : index
    %c0_3 = arith.constant 0 : index
    %11 = vector.load %arg2[%c0_2, %c0_3] : memref<36x256xf32, #tpu.memory_space<vmem>>, vector<36x256xf32>
    %12 = arith.mulf %10, %11 : vector<36x256xf32>
    %c0_4 = arith.constant 0 : index
    %c0_5 = arith.constant 0 : index
    %13 = vector.load %arg3[%c0_4, %c0_5] : memref<8x36xf32, #tpu.memory_space<vmem>>, vector<8x36xf32>
    %cst = arith.constant dense<0.000000e+00> : vector<8x256xf32>
    %14 = tpu.matmul %13, %12, %cst {dimension_numbers = #tpu.dot_dimension_numbers<[1], [0], [0], [1], [0, 0, 1, 1], [], []>} : vector<8x36xf32>, vector<36x256xf32>, vector<8x256xf32> -> vector<8x256xf32>
    %c0_6 = arith.constant 0 : index
    %c0_7 = arith.constant 0 : index
    %15 = vector.load %arg4[%c0_6, %c0_7] : memref<8x1xf32, #tpu.memory_space<vmem>>, vector<8x1xf32>
    %16 = vector.broadcast %15 : vector<8x1xf32> to vector<8x256xf32>
    %17 = arith.addf %14, %16 : vector<8x256xf32>
    %cst_8 = arith.constant 0.000000e+00 : f32
    %18 = vector.broadcast %cst_8 : f32 to vector<8x256xf32>
    %19 = arith.maximumf %17, %18 : vector<8x256xf32>
    %c0_9 = arith.constant 0 : index
    %c0_10 = arith.constant 0 : index
    %20 = vector.load %arg5[%c0_9, %c0_10] : memref<4x8xf32, #tpu.memory_space<vmem>>, vector<4x8xf32>
    %cst_11 = arith.constant dense<0.000000e+00> : vector<4x256xf32>
    %21 = tpu.matmul %20, %19, %cst_11 {dimension_numbers = #tpu.dot_dimension_numbers<[1], [0], [0], [1], [0, 0, 1, 1], [], []>} : vector<4x8xf32>, vector<8x256xf32>, vector<4x256xf32> -> vector<4x256xf32>
    %c0_12 = arith.constant 0 : index
    %c0_13 = arith.constant 0 : index
    %22 = vector.load %arg6[%c0_12, %c0_13] : memref<4x1xf32, #tpu.memory_space<vmem>>, vector<4x1xf32>
    %23 = vector.broadcast %22 : vector<4x1xf32> to vector<4x256xf32>
    %24 = arith.addf %21, %23 : vector<4x256xf32>
    %c0_14 = arith.constant 0 : index
    %c0_15 = arith.constant 0 : index
    %c0_16 = arith.constant 0 : index
    %25 = vector.load %arg7[%c0_14, %c0_15, %c0_16] : memref<1x4x256xf32, #tpu.memory_space<vmem>>, vector<1x4x256xf32>
    %26 = vector.shape_cast %25 : vector<1x4x256xf32> to vector<4x256xf32>
    %27 = vector.shape_cast %24 : vector<4x256xf32> to vector<1x4x256xf32>
    tpu.vector_store %arg7[%c0_14, %c0_15, %c0_16], %27 {strides = array<i32>} : memref<1x4x256xf32, #tpu.memory_space<vmem>>, vector<1x4x256xf32>,
    return
  }
  func.func @transform_0(%arg0: i32) -> (i32, i32, i32) {
    %c0_i32 = arith.constant 0 : i32
    %c0_i32_0 = arith.constant 0 : i32
    %c0_i32_1 = arith.constant 0 : i32
    return %arg0, %c0_i32, %c0_i32_0 : i32, i32, i32
  }
  func.func @transform_1(%arg0: i32) -> (i32, i32) {
    %c0_i32 = arith.constant 0 : i32
    %c0_i32_0 = arith.constant 0 : i32
    %c0_i32_1 = arith.constant 0 : i32
    return %c0_i32, %c0_i32_0 : i32, i32
  }
  func.func @transform_2(%arg0: i32) -> (i32, i32) {
    %c0_i32 = arith.constant 0 : i32
    %c0_i32_0 = arith.constant 0 : i32
    %c0_i32_1 = arith.constant 0 : i32
    return %c0_i32, %c0_i32_0 : i32, i32
  }
  func.func @transform_3(%arg0: i32) -> (i32, i32) {
    %c0_i32 = arith.constant 0 : i32
    %c0_i32_0 = arith.constant 0 : i32
    %c0_i32_1 = arith.constant 0 : i32
    return %c0_i32, %c0_i32_0 : i32, i32
  }
  func.func @transform_4(%arg0: i32) -> (i32, i32) {
    %c0_i32 = arith.constant 0 : i32
    %c0_i32_0 = arith.constant 0 : i32
    %c0_i32_1 = arith.constant 0 : i32
    return %c0_i32, %c0_i32_0 : i32, i32
  }
  func.func @transform_5(%arg0: i32) -> (i32, i32) {
    %c0_i32 = arith.constant 0 : i32
    %c0_i32_0 = arith.constant 0 : i32
    %c0_i32_1 = arith.constant 0 : i32
    return %c0_i32, %c0_i32_0 : i32, i32
  }
  func.func @transform_6(%arg0: i32) -> (i32, i32, i32) {
    %c0_i32 = arith.constant 0 : i32
    %c0_i32_0 = arith.constant 0 : i32
    %c0_i32_1 = arith.constant 0 : i32
    return %arg0, %c0_i32, %c0_i32_0 : i32, i32, i32
  }
}

</mosaic_0001>

<llo_original>
// kernel: bisehead_forward.1
$region0: #{bisehead_forward.1}
  #allocation0 [shape = 'u32[]', space=smem, size = 0x4, offset = 0x4, fixed_abs, tag = 'smem constant byte address 0x4 - core index']
  #allocation1 [shape = 'u32[144,128]{1,0:T(1,128)}', space=vmem, size = 0x12000, scoped, tag = 'internal scratch']
  %s0 = inlined_call_operand.vmem [shape: f32[2,4,256], index: 0, kind: input, shape index: {}]
  %s1 = inlined_call_operand.vmem [shape: f32[36,256], index: 1, kind: input, shape index: {}]
  %s2 = inlined_call_operand.vmem [shape: f32[8,36], index: 2, kind: input, shape index: {}]
  %s3 = inlined_call_operand.vmem [shape: f32[8,1], index: 3, kind: input, shape index: {}]
  %s4 = inlined_call_operand.vmem [shape: f32[4,8], index: 4, kind: input, shape index: {}]
  %s5 = inlined_call_operand.vmem [shape: f32[4,1], index: 5, kind: input, shape index: {}]
  %s6 = inlined_call_operand.vmem [shape: f32[2,4,256], index: 6, kind: output, shape index: {}]
  %s7 = sld [smem:[#allocation0]]
  $region57: #{bisehead_forward.1} parent=0
    _
  %s9 = ssub.s32 1, %s7
  %s10 = scalar_select 0, %s9, %s7
  loop: start=0, step=1, limit=4
  $region2: #{bisehead_forward.1} parent=0 // loop_pre_header
    _
  $region3: #{bisehead_forward.1} parent=0 // loop_header
    %s12 = sphi 0, %s16
    %p13 = scmp.ge.s32.totalorder %s12, 4
    %s22 = sphi 0, %s24
    %s25 = sphi 0, %s22
    %s26 = sphi 0, %s25
    %s42 = sphi 0, %s26
    %s46 = sphi 0, %s46
    %s48 = sphi 0, %s46
    %s49 = sphi 0, %s48
    %s63 = sphi 0, %s49
    %s67 = sphi 0, %s67
    %s69 = sphi 0, %s67
    %s70 = sphi 0, %s69
    %s84 = sphi 0, %s70
    %s88 = sphi 0, %s88
    %s90 = sphi 0, %s88
    %s91 = sphi 0, %s90
    %s105 = sphi 0, %s91
    %s109 = sphi 0, %s109
    %s111 = sphi 0, %s109
    %s112 = sphi 0, %s111
    %s126 = sphi 0, %s112
    %s130 = sphi 0, %s130
    %s132 = sphi 0, %s130
    %s133 = sphi 0, %s132
    %s147 = sphi 0, %s133
    %s153 = sphi 0, %s155
    %s156 = sphi 0, %s153
    %s157 = sphi 0, %s156
    %s173 = sphi 0, %s157
  $region4: #{bisehead_forward.1} parent=0 // loop_header_branch
    %15 = sbr.rel (%p13) target = $region8
  $region5: #{bisehead_forward.1} parent=0 // loop_body
    %s17 = ssub.s32 %s12, 1
    %s18 = ssub.s32 %s12, 2
    %s19 = sadd.s32 %s12, 1
    %s20 = ssub.s32 %s12, %s19
    %p21 = scmp.eq.s32.totalorder %s20, 0
    %s23 = sadd.s32 %s22, 1
    %s24 = scalar_select %p21, %s22, %s23
    %p27 = pneg %p21
    %p28 = scmp.eq.s32.totalorder %s12, 1
    %p29 = por %p27, %p28
    %p30 = scmp.ne.s32.totalorder %s22, %s25
    %p31 = scmp.eq.s32.totalorder %s12, 0
    %p32 = por %p30, %p31
    %p33 = scmp.ne.s32.totalorder %s22, %s25
    %p34 = scmp.eq.s32.totalorder %s17, 1
    %p35 = por %p33, %p34
    %p36 = scmp.ne.s32.totalorder %s25, %s26
    %p37 = scmp.eq.s32.totalorder %s17, 0
    %p38 = por %p36, %p37
    %p39 = scmp.ne.s32.totalorder %s25, %s26
    %p40 = scmp.eq.s32.totalorder %s18, 1
    %p41 = por %p39, %p40
    %p43 = scmp.ne.s32.totalorder %s26, %s42
    %p44 = scmp.eq.s32.totalorder %s18, 0
    %p45 = por %p43, %p44
    %s47 = sadd.s32 %s46, 1
    %p50 = scmp.eq.s32.totalorder %s12, 1
    %p51 = scmp.ne.s32.totalorder %s46, %s48
    %p52 = scmp.eq.s32.totalorder %s12, 0
    %p53 = por %p51, %p52
    %p54 = scmp.ne.s32.totalorder %s46, %s48
    %p55 = scmp.eq.s32.totalorder %s17, 1
    %p56 = por %p54, %p55
    %p57 = scmp.ne.s32.totalorder %s48, %s49
    %p58 = scmp.eq.s32.totalorder %s17, 0
    %p59 = por %p57, %p58
    %p60 = scmp.ne.s32.totalorder %s48, %s49
    %p61 = scmp.eq.s32.totalorder %s18, 1
    %p62 = por %p60, %p61
    %p64 = scmp.ne.s32.totalorder %s49, %s63
    %p65 = scmp.eq.s32.totalorder %s18, 0
    %p66 = por %p64, %p65
    %s68 = sadd.s32 %s67, 1
    %p71 = scmp.eq.s32.totalorder %s12, 1
    %p72 = scmp.ne.s32.totalorder %s67, %s69
    %p73 = scmp.eq.s32.totalorder %s12, 0
    %p74 = por %p72, %p73
    %p75 = scmp.ne.s32.totalorder %s67, %s69
    %p76 = scmp.eq.s32.totalorder %s17, 1
    %p77 = por %p75, %p76
    %p78 = scmp.ne.s32.totalorder %s69, %s70
    %p79 = scmp.eq.s32.totalorder %s17, 0
    %p80 = por %p78, %p79
    %p81 = scmp.ne.s32.totalorder %s69, %s70
    %p82 = scmp.eq.s32.totalorder %s18, 1
    %p83 = por %p81, %p82
    %p85 = scmp.ne.s32.totalorder %s70, %s84
    %p86 = scmp.eq.s32.totalorder %s18, 0
    %p87 = por %p85, %p86
    %s89 = sadd.s32 %s88, 1
    %p92 = scmp.eq.s32.totalorder %s12, 1
    %p93 = scmp.ne.s32.totalorder %s88, %s90
    %p94 = scmp.eq.s32.totalorder %s12, 0
    %p95 = por %p93, %p94
    %p96 = scmp.ne.s32.totalorder %s88, %s90
    %p97 = scmp.eq.s32.totalorder %s17, 1
    %p98 = por %p96, %p97
    %p99 = scmp.ne.s32.totalorder %s90, %s91
    %p100 = scmp.eq.s32.totalorder %s17, 0
    %p101 = por %p99, %p100
    %p102 = scmp.ne.s32.totalorder %s90, %s91
    %p103 = scmp.eq.s32.totalorder %s18, 1
    %p104 = por %p102, %p103
    %p106 = scmp.ne.s32.totalorder %s91, %s105
    %p107 = scmp.eq.s32.totalorder %s18, 0
    %p108 = por %p106, %p107
    %s110 = sadd.s32 %s109, 1
    %p113 = scmp.eq.s32.totalorder %s12, 1
    %p114 = scmp.ne.s32.totalorder %s109, %s111
    %p115 = scmp.eq.s32.totalorder %s12, 0
    %p116 = por %p114, %p115
    %p117 = scmp.ne.s32.totalorder %s109, %s111
    %p118 = scmp.eq.s32.totalorder %s17, 1
    %p119 = por %p117, %p118
    %p120 = scmp.ne.s32.totalorder %s111, %s112
    %p121 = scmp.eq.s32.totalorder %s17, 0
    %p122 = por %p120, %p121
    %p123 = scmp.ne.s32.totalorder %s111, %s112
    %p124 = scmp.eq.s32.totalorder %s18, 1
    %p125 = por %p123, %p124
    %p127 = scmp.ne.s32.totalorder %s112, %s126
    %p128 = scmp.eq.s32.totalorder %s18, 0
    %p129 = por %p127, %p128
    %s131 = sadd.s32 %s130, 1
    %p134 = scmp.eq.s32.totalorder %s12, 1
    %p135 = scmp.ne.s32.totalorder %s130, %s132
    %p136 = scmp.eq.s32.totalorder %s12, 0
    %p137 = por %p135, %p136
    %p138 = scmp.ne.s32.totalorder %s130, %s132
    %p139 = scmp.eq.s32.totalorder %s17, 1
    %p140 = por %p138, %p139
    %p141 = scmp.ne.s32.totalorder %s132, %s133
    %p142 = scmp.eq.s32.totalorder %s17, 0
    %p143 = por %p141, %p142
    %p144 = scmp.ne.s32.totalorder %s132, %s133
    %p145 = scmp.eq.s32.totalorder %s18, 1
    %p146 = por %p144, %p145
    %p148 = scmp.ne.s32.totalorder %s133, %s147
    %p149 = scmp.eq.s32.totalorder %s18, 0
    %p150 = por %p148, %p149
    %s151 = ssub.s32 %s12, %s19
    %p152 = scmp.eq.s32.totalorder %s151, 0
    %s154 = sadd.s32 %s153, 1
    %s155 = scalar_select %p152, %s153, %s154
    %p158 = pneg %p152
    %p159 = scmp.eq.s32.totalorder %s12, 1
    %p160 = por %p158, %p159
    %p161 = scmp.ne.s32.totalorder %s153, %s156
    %p162 = scmp.eq.s32.totalorder %s12, 0
    %p163 = por %p161, %p162
    %p164 = scmp.ne.s32.totalorder %s153, %s156
    %p165 = scmp.eq.s32.totalorder %s17, 1
    %p166 = por %p164, %p165
    %p167 = scmp.ne.s32.totalorder %s156, %s157
    %p168 = scmp.eq.s32.totalorder %s17, 0
    %p169 = por %p167, %p168
    %p170 = scmp.ne.s32.totalorder %s156, %s157
    %p171 = scmp.eq.s32.totalorder %s18, 1
    %p172 = por %p170, %p171
    %p174 = scmp.ne.s32.totalorder %s157, %s173
    %p175 = scmp.eq.s32.totalorder %s18, 0
    %p176 = por %p174, %p175
    %p177 = scmp.le.s32.totalorder 1, %s12
    %p178 = scmp.lt.s32.totalorder %s12, 3
    %p179 = pnand %p177, %p178
    %p180 = pneg %p179
    // Predicated region
    $region9: #{bisehead_forward.1} parent=5 // pred_check
      _
    $region10: #{bisehead_forward.1} parent=5 // pred_check_branch
      %182 = sbr.rel (%p179) target = $region12
    $region11: #{bisehead_forward.1} parent=5 // pred_region
      %s183 = ssub.s32 %s12, 1
      // Predicated region
      $region13: #{bisehead_forward.1} parent=11 // pred_check
        %p184 = pneg %p59
      $region14: #{bisehead_forward.1} parent=11 // pred_check_branch
        %186 = sbr.rel (%p184) target = $region16
      $region15: #{bisehead_forward.1} parent=11 // pred_region
        _
      $region16: #{bisehead_forward.1} parent=11 // pred_fallthru
        _
      // Predicated region
      $region17: #{bisehead_forward.1} parent=11 // pred_check
        %p187 = pneg %p80
      $region18: #{bisehead_forward.1} parent=11 // pred_check_branch
        %189 = sbr.rel (%p187) target = $region20
      $region19: #{bisehead_forward.1} parent=11 // pred_region
        _
      $region20: #{bisehead_forward.1} parent=11 // pred_fallthru
        _
      // Predicated region
      $region21: #{bisehead_forward.1} parent=11 // pred_check
        %p190 = pneg %p101
      $region22: #{bisehead_forward.1} parent=11 // pred_check_branch
        %192 = sbr.rel (%p190) target = $region24
      $region23: #{bisehead_forward.1} parent=11 // pred_region
        _
      $region24: #{bisehead_forward.1} parent=11 // pred_fallthru
        _
      // Predicated region
      $region25: #{bisehead_forward.1} parent=11 // pred_check
        %p193 = pneg %p122
      $region26: #{bisehead_forward.1} parent=11 // pred_check_branch
        %195 = sbr.rel (%p193) target = $region28
      $region27: #{bisehead_forward.1} parent=11 // pred_region
        _
      $region28: #{bisehead_forward.1} parent=11 // pred_fallthru
        _
      // Predicated region
      $region29: #{bisehead_forward.1} parent=11 // pred_check
        %p196 = pneg %p143
      $region30: #{bisehead_forward.1} parent=11 // pred_check_branch
        %198 = sbr.rel (%p196) target = $region32
      $region31: #{bisehead_forward.1} parent=11 // pred_region
        _
      $region32: #{bisehead_forward.1} parent=11 // pred_fallthru
        _
    $region12: #{bisehead_forward.1} parent=5 // pred_fallthru
      _
    %p199 = scmp.lt.s32.totalorder %s12, 2
    // Predicated region
    $region33: #{bisehead_forward.1} parent=5 // pred_check
      %p200 = pneg %p199
    $region34: #{bisehead_forward.1} parent=5 // pred_check_branch
      %202 = sbr.rel (%p200) target = $region36
    $region35: #{bisehead_forward.1} parent=5 // pred_region
      // Predicated region
      $region37: #{bisehead_forward.1} parent=35 // pred_check
        %p203 = pneg %p32
      $region38: #{bisehead_forward.1} parent=35 // pred_check_branch
        %205 = sbr.rel (%p203) target = $region40
      $region39: #{bisehead_forward.1} parent=35 // pred_region
        %p206 = scmp.lt.s32.totalorder %s12, 1
        %s207 = scalar_select %p206, %s12, 1
        %s208 = smul.addr %s207, 2
        %s209 = smul.addr %s208, 4
        %s210 = scalar_lea.vmem %s0, %s209
      $region40: #{bisehead_forward.1} parent=35 // pred_fallthru
        _
    $region36: #{bisehead_forward.1} parent=5 // pred_fallthru
      _
    %p211 = scmp.le.s32.totalorder 1, %s12
    %p212 = scmp.lt.s32.totalorder %s12, 3
    %p213 = pnand %p211, %p212
    %p214 = pneg %p213
    // Predicated region
    $region41: #{bisehead_forward.1} parent=5 // pred_check
      _
    $region42: #{bisehead_forward.1} parent=5 // pred_check_branch
      %216 = sbr.rel (%p213) target = $region44
    $region43: #{bisehead_forward.1} parent=5 // pred_region
      %s217 = ssub.s32 %s12, 1
      %p218 = scmp.lt.s32.totalorder %s17, 1
      %s219 = scalar_select %p218, %s17, 1
      %s220 = smul.addr %s219, 2
      %s221 = smul.addr %s220, 4
      %s222 = scalar_lea.vmem %s0, %s221
      %p223 = pneg %p38
      %p224 = pneg %p35
      %p225 = pneg %p59
      %p226 = pneg %p56
      %p227 = pneg %p80
      %p228 = pneg %p77
      %p229 = pneg %p101
      %p230 = pneg %p98
      %p231 = pneg %p122
      %p232 = pneg %p119
      %p233 = pneg %p143
      %p234 = pneg %p140
      %p235 = pneg %p169
      %p236 = pneg %p166
      %p237 = scmp.lt.s32.totalorder %s17, 1
      %s238 = scalar_select %p237, %s17, 1
      %s239 = smul.addr %s238, 2
      %s240 = smul.addr %s239, 4
      %s241 = scalar_lea.vmem %s6, %s240
      %p242 = scmp.lt.s32.totalorder %s17, 1
      %s243 = scalar_select %p242, %s17, 1
      %s244 = smul.addr %s243, 2
      %s245 = smul.addr %s244, 4
      %s246 = scalar_lea.vmem %s0, %s245
      %p247 = scmp.lt.s32.totalorder %s17, 1
      %s248 = scalar_select %p247, %s17, 1
      %s249 = smul.addr %s248, 2
      %s250 = smul.addr %s249, 4
      %s251 = scalar_lea.vmem %s6, %s250
      %v252 = vld [vmem:[%s246] sm:$0xff]
      %v254 = vcombine.high %v252, %v252
      %256 = vrot.lane.b32.xlu0 %v252, 17
      %v257 = vpop.permute.xlu0 %256
      %258 = vrot.lane.b32.xlu0 %v254, 17
      %v259 = vpop.permute.xlu0 %258
      %v260 = vlaneseq
      %v261 = vand.u32 %v260, 127
      %vm262 = vcmp.lt.s32.totalorder %v261, 17
      %v263 = vsel %vm262, %v257, %v259
      %v264 = vsel %vm262, %v259, %v257
      %265 = vrot.lane.b32.xlu0 %v252, 16
      %v266 = vpop.permute.xlu0 %265
      %267 = vrot.lane.b32.xlu0 %v254, 16
      %v268 = vpop.permute.xlu0 %267
      %vm269 = vcmp.lt.s32.totalorder %v261, 16
      %v270 = vsel %vm269, %v266, %v268
      %v271 = vsel %vm269, %v268, %v266
      %272 = vrot.lane.b32.xlu0 %v252, 15
      %v273 = vpop.permute.xlu0 %272
      %274 = vrot.lane.b32.xlu0 %v254, 15
      %v275 = vpop.permute.xlu0 %274
      %vm276 = vcmp.lt.s32.totalorder %v261, 15
      %v277 = vsel %vm276, %v273, %v275
      %v278 = vsel %vm276, %v275, %v273
      %279 = vrot.lane.b32.xlu0 %v252, 1
      %v280 = vpop.permute.xlu0 %279
      %281 = vrot.lane.b32.xlu0 %v254, 1
      %v282 = vpop.permute.xlu0 %281
      %vm283 = vcmp.lt.s32.totalorder %v261, 1
      %v284 = vsel %vm283, %v280, %v282
      %v285 = vsel %vm283, %v282, %v280
      %286 = vrot.lane.b32.xlu0 %v252, 127
      %v287 = vpop.permute.xlu0 %286
      %288 = vrot.lane.b32.xlu0 %v254, 127
      %v289 = vpop.permute.xlu0 %288
      %vm290 = vcmp.lt.s32.totalorder %v261, 127
      %v291 = vsel %vm290, %v287, %v289
      %v292 = vsel %vm290, %v289, %v287
      %293 = vrot.lane.b32.xlu0 %v252, 113
      %v294 = vpop.permute.xlu0 %293
      %295 = vrot.lane.b32.xlu0 %v254, 113
      %v296 = vpop.permute.xlu0 %295
      %vm297 = vcmp.lt.s32.totalorder %v261, 113
      %v298 = vsel %vm297, %v294, %v296
      %v299 = vsel %vm297, %v296, %v294
      %300 = vrot.lane.b32.xlu0 %v252, 112
      %v301 = vpop.permute.xlu0 %300
      %302 = vrot.lane.b32.xlu0 %v254, 112
      %v303 = vpop.permute.xlu0 %302
      %vm304 = vcmp.lt.s32.totalorder %v261, 112
      %v305 = vsel %vm304, %v301, %v303
      %v306 = vsel %vm304, %v303, %v301
      %307 = vrot.lane.b32.xlu0 %v252, 111
      %v308 = vpop.permute.xlu0 %307
      %309 = vrot.lane.b32.xlu0 %v254, 111
      %v310 = vpop.permute.xlu0 %309
      %vm311 = vcmp.lt.s32.totalorder %v261, 111
      %v312 = vsel %vm311, %v308, %v310
      %v313 = vsel %vm311, %v310, %v308
      %v316 = vrot.slane %v271, 4
      %v317 = vrot.slane %v270, 4
      %v322 = vrot.slane %v285, 4
      %v323 = vrot.slane %v284, 4
      %v328 = vrot.slane %v291, 4
      %v329 = vrot.slane %v292, 4
      %v334 = vrot.slane %v305, 4
      %v335 = vrot.slane %v306, 4
      %vm338 = vcmask 1043456
      %v339 = vsel %vm338, %v264, %v316
      %v340 = vsel %vm338, %v263, %v317
      %v341 = vsel %vm338, %v278, %v322
      %v342 = vsel %vm338, %v277, %v323
      %v343 = vsel %vm338, %v252, %v328
      %v344 = vsel %vm338, %v254, %v329
      %v345 = vsel %vm338, %v298, %v334
      %v346 = vsel %vm338, %v299, %v335
      %v347 = vld [vmem:[%s1] sm:$0xff]
      %v348 = vld [vmem:[%s1 + $0x8] sm:$0xff]
      %v349 = vld [vmem:[%s1 + $0x10] sm:$0xff]
      %v350 = vld [vmem:[%s1 + $0x18] sm:$0xff]
      %v351 = vld [vmem:[%s1 + $0x20] sm:$0xff]
      %v352 = vld [vmem:[%s1 + $0x28] sm:$0xff]
      %v353 = vld [vmem:[%s1 + $0x30] sm:$0xff]
      %v354 = vld [vmem:[%s1 + $0x38] sm:$0xff]
      %v355 = vld [vmem:[%s1 + $0x40] sm:$0xf]
      %v356 = vld [vmem:[%s1 + $0x48] sm:$0xf]
      %v357 = vmul.f32 %v339, %v347
      %v358 = vmul.f32 %v340, %v348
      %v359 = vmul.f32 %v341, %v349
      %v360 = vmul.f32 %v342, %v350
      %v361 = vmul.f32 %v343, %v351
      %v362 = vmul.f32 %v344, %v352
      %v363 = vmul.f32 %v345, %v353
      %v364 = vmul.f32 %v346, %v354
      %v365 = vmul.f32 %v312, %v355
      %v366 = vmul.f32 %v313, %v356
      %v367 = vld [vmem:[%s2] sm:$0xff]
      %v368 = vld [vmem:[%s3] sm:$0xff]
      %370 = vset.pattern.permute.xlu0 0
      %371 = vperm.xlu0 %370, %v368
      %v372 = vpop.permute.xlu0 %371
      %vm374 = vcmask 293888
      %v376 = vsel %vm374, %v367, 0
      %v379 = vsel %vm338, %v365, 0
      %v382 = vsel %vm338, %v366, 0
      %384 = vmatprep.subr.mxu0 0.0
      %385 = vmatpush1.msra.mxu0 0.0
      %386 = vmatprep.subr.mxu0 0.0
      %387 = vmatpush1.msra.mxu0 0.0
      %388 = vmatprep.subr.mxu0 0.0
      %389 = vmatpush1.msra.mxu0 0.0
      %390 = vmatprep.subr.mxu0 0.0
      %391 = vmatpush1.msra.mxu0 0.0
      %392 = vmatprep.subr.mxu0 0.0
      %393 = vmatpush1.msra.mxu0 0.0
      %394 = vmatprep.subr.mxu0 0.0
      %395 = vmatpush1.msra.mxu0 0.0
      %396 = vmatprep.subr.mxu0 0.0
      %397 = vmatpush1.msra.mxu0 0.0
      %398 = vmatprep.subr.mxu0 0.0
      %399 = vmatpush1.msra.mxu0 0.0
      %400 = vmatprep.subr.mxu0 0.0
      %401 = vmatpush1.msra.mxu0 0.0
      %402 = vmatprep.subr.mxu0 0.0
      %403 = vmatpush1.msra.mxu0 0.0
      %404 = vmatprep.subr.mxu0 0.0
      %405 = vmatpush1.msra.mxu0 0.0
      %406 = vmatprep.subr.mxu0 %v382
      %407 = vmatpush1.msra.mxu0 %v379
      %408 = vmatprep.subr.mxu0 %v364
      %409 = vmatpush1.msra.mxu0 %v363
      %410 = vmatprep.subr.mxu0 %v362
      %411 = vmatpush1.msra.mxu0 %v361
      %412 = vmatprep.subr.mxu0 %v360
      %413 = vmatpush1.msra.mxu0 %v359
      %414 = vmatprep.subr.mxu0 %v358
      %415 = vmatpush1.msra.mxu0 %v357
      %416 = vmatprep.subr.mxu0 0.0
      %417 = vmatpush2.msra.mxu0 0.0
      %418 = vmatprep.subr.mxu0 0.0
      %419 = vmatpush2.msra.mxu0 0.0
      %420 = vmatprep.subr.mxu0 0.0
      %421 = vmatpush2.msra.mxu0 0.0
      %422 = vmatprep.subr.mxu0 0.0
      %423 = vmatpush2.msra.mxu0 0.0
      %424 = vmatprep.subr.mxu0 0.0
      %425 = vmatpush2.msra.mxu0 0.0
      %426 = vmatprep.subr.mxu0 0.0
      %427 = vmatpush2.msra.mxu0 0.0
      %428 = vmatprep.subr.mxu0 0.0
      %429 = vmatpush2.msra.mxu0 0.0
      %430 = vmatprep.subr.mxu0 0.0
      %431 = vmatpush2.msra.mxu0 0.0
      %432 = vmatprep.subr.mxu0 0.0
      %433 = vmatpush2.msra.mxu0 0.0
      %434 = vmatprep.subr.mxu0 0.0
      %435 = vmatpush2.msra.mxu0 0.0
      %436 = vmatprep.subr.mxu0 0.0
      %437 = vmatpush2.msra.mxu0 0.0
      %438 = vmatprep.subr.mxu0 0.0
      %439 = vmatpush2.msra.mxu0 0.0
      %440 = vmatprep.subr.mxu0 0.0
      %441 = vmatpush2.msra.mxu0 0.0
      %442 = vmatprep.subr.mxu0 0.0
      %443 = vmatpush2.msra.mxu0 0.0
      %444 = vmatprep.subr.mxu0 0.0
      %445 = vmatpush2.msra.mxu0 0.0
      %446 = vmatprep.subr.mxu0 0.0
      %447 = vmatpush2.msra.mxu0 0.0
      %448 = vmatprep.mubr.f32.mxu0 0.0
      %449 = vmatmul.mubr.f32.gmra.mxu0 %v376
      %v450 = vpop.f32.mrf.mxu0
      %v451 = vadd.f32 %v372, %v450
      %v452 = vpop.f32.mrf.mxu0
      %v453 = vadd.f32 %v372, %v452
      %454 = vdwg.mxu0
      %v455 = vmax.f32 %v451, 0.0
      %v456 = vmax.f32 %v453, 0.0
      %v457 = vld [vmem:[%s4] sm:$0xf]
      %v458 = vld [vmem:[%s5] sm:$0xf]
      %460 = vset.pattern.permute.xlu0 0
      %461 = vperm.xlu0 %460, %v458
      %v462 = vpop.permute.xlu0 %461
      %vm464 = vcmask 64512
      %v466 = vsel %vm464, %v457, 0
      %468 = vmatprep.subr.mxu0 0.0
      %469 = vmatpush1.msra.mxu0 0.0
      %470 = vmatprep.subr.mxu0 0.0
      %471 = vmatpush1.msra.mxu0 0.0
      %472 = vmatprep.subr.mxu0 0.0
      %473 = vmatpush1.msra.mxu0 0.0
      %474 = vmatprep.subr.mxu0 0.0
      %475 = vmatpush1.msra.mxu0 0.0
      %476 = vmatprep.subr.mxu0 0.0
      %477 = vmatpush1.msra.mxu0 0.0
      %478 = vmatprep.subr.mxu0 0.0
      %479 = vmatpush1.msra.mxu0 0.0
      %480 = vmatprep.subr.mxu0 0.0
      %481 = vmatpush1.msra.mxu0 0.0
      %482 = vmatprep.subr.mxu0 0.0
      %483 = vmatpush1.msra.mxu0 0.0
      %484 = vmatprep.subr.mxu0 0.0
      %485 = vmatpush1.msra.mxu0 0.0
      %486 = vmatprep.subr.mxu0 0.0
      %487 = vmatpush1.msra.mxu0 0.0
      %488 = vmatprep.subr.mxu0 0.0
      %489 = vmatpush1.msra.mxu0 0.0
      %490 = vmatprep.subr.mxu0 0.0
      %491 = vmatpush1.msra.mxu0 0.0
      %492 = vmatprep.subr.mxu0 0.0
      %493 = vmatpush1.msra.mxu0 0.0
      %494 = vmatprep.subr.mxu0 0.0
      %495 = vmatpush1.msra.mxu0 0.0
      %496 = vmatprep.subr.mxu0 0.0
      %497 = vmatpush1.msra.mxu0 0.0
      %498 = vmatprep.subr.mxu0 %v456
      %499 = vmatpush1.msra.mxu0 %v455
      %500 = vmatprep.subr.mxu0 0.0
      %501 = vmatpush2.msra.mxu0 0.0
      %502 = vmatprep.subr.mxu0 0.0
      %503 = vmatpush2.msra.mxu0 0.0
      %504 = vmatprep.subr.mxu0 0.0
      %505 = vmatpush2.msra.mxu0 0.0
      %506 = vmatprep.subr.mxu0 0.0
      %507 = vmatpush2.msra.mxu0 0.0
      %508 = vmatprep.subr.mxu0 0.0
      %509 = vmatpush2.msra.mxu0 0.0
      %510 = vmatprep.subr.mxu0 0.0
      %511 = vmatpush2.msra.mxu0 0.0
      %512 = vmatprep.subr.mxu0 0.0
      %513 = vmatpush2.msra.mxu0 0.0
      %514 = vmatprep.subr.mxu0 0.0
      %515 = vmatpush2.msra.mxu0 0.0
      %516 = vmatprep.subr.mxu0 0.0
      %517 = vmatpush2.msra.mxu0 0.0
      %518 = vmatprep.subr.mxu0 0.0
      %519 = vmatpush2.msra.mxu0 0.0
      %520 = vmatprep.subr.mxu0 0.0
      %521 = vmatpush2.msra.mxu0 0.0
      %522 = vmatprep.subr.mxu0 0.0
      %523 = vmatpush2.msra.mxu0 0.0
      %524 = vmatprep.subr.mxu0 0.0
      %525 = vmatpush2.msra.mxu0 0.0
      %526 = vmatprep.subr.mxu0 0.0
      %527 = vmatpush2.msra.mxu0 0.0
      %528 = vmatprep.subr.mxu0 0.0
      %529 = vmatpush2.msra.mxu0 0.0
      %530 = vmatprep.subr.mxu0 0.0
      %531 = vmatpush2.msra.mxu0 0.0
      %532 = vmatprep.mubr.f32.mxu0 0.0
      %533 = vmatmul.mubr.f32.gmra.mxu0 %v466
      %v534 = vpop.f32.mrf.mxu0
      %v535 = vadd.f32 %v462, %v534
      %v536 = vpop.f32.mrf.mxu0
      %v537 = vadd.f32 %v462, %v536
      %538 = vdwg.mxu0
      %v541 = vcombine.low %v535, %v537
      %543 = vst [vmem:[%s251] sm:$0xff] %v541
      %p544 = scmp.lt.s32.totalorder %s17, 1
      %s545 = scalar_select %p544, %s17, 1
      %s546 = smul.addr %s545, 2
      %s547 = smul.addr %s546, 4
      %s548 = scalar_lea.vmem %s6, %s547
      // Predicated region
      $region45: #{bisehead_forward.1} parent=43 // pred_check
        %p549 = pneg %p166
      $region46: #{bisehead_forward.1} parent=43 // pred_check_branch
        %551 = sbr.rel (%p549) target = $region48
      $region47: #{bisehead_forward.1} parent=43 // pred_region
        _
      $region48: #{bisehead_forward.1} parent=43 // pred_fallthru
        _
    $region44: #{bisehead_forward.1} parent=5 // pred_fallthru
      _
    %p552 = scmp.le.s32.totalorder 2, %s12
    // Predicated region
    $region49: #{bisehead_forward.1} parent=5 // pred_check
      %p553 = pneg %p552
    $region50: #{bisehead_forward.1} parent=5 // pred_check_branch
      %555 = sbr.rel (%p553) target = $region52
    $region51: #{bisehead_forward.1} parent=5 // pred_region
      %s556 = ssub.s32 %s12, 2
      // Predicated region
      $region53: #{bisehead_forward.1} parent=51 // pred_check
        %p557 = pneg %p172
      $region54: #{bisehead_forward.1} parent=51 // pred_check_branch
        %559 = sbr.rel (%p557) target = $region56
      $region55: #{bisehead_forward.1} parent=51 // pred_region
        %p560 = scmp.lt.s32.totalorder %s18, 1
        %s561 = scalar_select %p560, %s18, 1
        %s562 = smul.addr %s561, 2
        %s563 = smul.addr %s562, 4
        %s564 = scalar_lea.vmem %s6, %s563
      $region56: #{bisehead_forward.1} parent=51 // pred_fallthru
        _
    $region52: #{bisehead_forward.1} parent=5 // pred_fallthru
      _
  $region6: #{bisehead_forward.1} parent=0 // loop_footer
    %s16 = sadd.s32 1, %s12
  $region7: #{bisehead_forward.1} parent=0 // loop_footer_branch
    %11 = sbr.rel target = $region3
  $region8: #{bisehead_forward.1} parent=0 // loop_exit
    _

</llo_original>
